<compile_context>
chip_gen: v5e
topology: v5e:2x2
jax: 0.10.0
libtpu: 0.0.40
codegen_flags: <defaults>
</compile_context>

<pallas_src>
import math
import functools

import jax
import jax.numpy as jnp
from jax.experimental import pallas as pl
from jax.experimental.pallas import tpu as pltpu


def _attention_head_kernel(x_ref, wqkv_ref, bqkv_ref, out_ref, probs_ref,
                           *, seq_len, head_size, use_bf16, approx_recip):
    L = seq_len
    Cout = head_size
    tb = out_ref.shape[0]                      # batch sequences in this tile

    xb = x_ref[...]                            # (tb*L, Cin) flat rows
    w = wqkv_ref[...]                          # (Cin, 3*Cout), Wq pre-scaled

    if use_bf16:
        # bf16 MXU operands, f32 accumulation (preferred_element_type below).
        xb_m = xb.astype(jnp.bfloat16)
        w_m = w.astype(jnp.bfloat16)
    else:
        xb_m, w_m = xb, w

    # Single fused QKV projection + one bias broadcast.
    qkv = jnp.dot(xb_m, w_m, preferred_element_type=jnp.float32) + bqkv_ref[...]

    q = qkv[:, 0 * Cout:1 * Cout].reshape(tb, L, Cout)
    k = qkv[:, 1 * Cout:2 * Cout].reshape(tb, L, Cout)
    v = qkv[:, 2 * Cout:3 * Cout].reshape(tb, L, Cout)

    # Batched scores: contract the last dims directly (no explicit k.T).
    scores = jnp.einsum('bld,bmd->blm', q, k,
                        preferred_element_type=jnp.float32)       # (tb, L, L)

    # Numerically-stable softmax over the key axis (kept in f32 on all chips).
    m = jnp.max(scores, axis=-1, keepdims=True)
    e = jnp.exp(scores - m)
    denom = jnp.sum(e, axis=-1, keepdims=True)
    probs = e * pl.reciprocal(denom, approx=approx_recip)

    # Dropout(p=0.0) == identity -> no-op.

    if use_bf16:
        out = jnp.einsum('blm,bmd->bld', probs.astype(jnp.bfloat16),
                         v.astype(jnp.bfloat16),
                         preferred_element_type=jnp.float32)      # (tb, L, Cout)
    else:
        out = jnp.einsum('blm,bmd->bld', probs, v,
                         preferred_element_type=jnp.float32)

    # Lane-dense flattened stores: (tb, L*Cout) and (tb, L*L).
    out_ref[...] = out.reshape(tb, L * Cout).astype(out_ref.dtype)
    probs_ref[...] = probs.reshape(tb, L * L).astype(probs_ref.dtype)


def _tile_batch(N, L, target_rows=512):
    """Pick (tb, n_pad): ~target_rows projection rows per grid step.

    Keeps the flattened-output block (tb, L*Cout) legal: either tb == n_pad
    (single grid step) or tb is a multiple of 8 (sublane-aligned multi-step),
    and caps tb so large batches get >=2 grid steps (v7x megacore sharding).
    """
    tb = max(1, target_rows // max(L, 1))
    if N <= max(tb, 8) or N < 16:
        # Small batch: one grid step covering the whole (lightly padded) batch.
        tb = N
        while (tb * L) % 8 != 0:
            tb += 1
        return tb, tb
    # Large batch: 8-aligned tiles; ensure at least 2 grid steps.
    tb = max(8, (tb // 8) * 8)
    tb = min(tb, max(8, ((N // 2) // 8) * 8))
    n_pad = pl.cdiv(N, tb) * tb
    return tb, n_pad


def attention_head(x, wq, wk, wv, bq, bk, bv, *, head_size,
                   use_bf16_matmul=False, approx_reciprocal=False,
                   target_rows=512):
    """x: (N, L, Cin); wq/wk/wv: (Cin, Cout) (i.e. PyTorch weight transposed);
    bq/bk/bv: (1, Cout).  Returns (attention_output (N,L,Cout), probs (N,L,L))."""
    N, L, Cin = x.shape
    Cout = wq.shape[1]

    # Fold the 1/sqrt(head_size) score scaling into the Q projection parameters,
    # and fuse the three projections into one (Cin, 3*Cout) weight / (1, 3*Cout) bias.
    scale = 1.0 / math.sqrt(head_size)
    wqkv = jnp.concatenate([wq * scale, wk, wv], axis=1).astype(jnp.float32)
    bqkv = jnp.concatenate([bq * scale, bk, bv], axis=1).astype(jnp.float32)
    if use_bf16_matmul:
        wqkv = wqkv.astype(jnp.bfloat16)   # halves resident-weight DMA; bias stays f32

    tb, n_pad = _tile_batch(N, L, target_rows)
    if n_pad != N:
        x = jnp.pad(x, ((0, n_pad - N), (0, 0), (0, 0)))
    x2d = x.reshape(n_pad * L, Cin)        # flat rows -> dense 2-D projection tiles

    grid = (n_pad // tb,)

    kernel = functools.partial(_attention_head_kernel,
                               seq_len=L, head_size=Cout,
                               use_bf16=use_bf16_matmul,
                               approx_recip=approx_reciprocal)

    grid_spec = pltpu.PrefetchScalarGridSpec(
        num_scalar_prefetch=0,
        grid=grid,
        in_specs=[
            pl.BlockSpec((tb * L, Cin), lambda n: (n, 0)),        # x rows for this tile
            pl.BlockSpec((Cin, 3 * Cout), lambda n: (0, 0)),      # fused Wqkv (resident)
            pl.BlockSpec((1, 3 * Cout), lambda n: (0, 0)),        # fused bias (resident)
        ],
        out_specs=[
            pl.BlockSpec((tb, L * Cout), lambda n: (n, 0)),       # lane-dense output slab
            pl.BlockSpec((tb, L * L), lambda n: (n, 0)),          # lane-dense probs slab
        ],
    )

    out_shapes = (
        jax.ShapeDtypeStruct((n_pad, L * Cout), jnp.float32),
        jax.ShapeDtypeStruct((n_pad, L * L), jnp.float32),
    )

    out2d, probs2d = pl.pallas_call(
        kernel,
        out_shape=out_shapes,
        grid_spec=grid_spec,
        compiler_params=pltpu.CompilerParams(
            # Batch-tile axis is embarrassingly parallel -> shards across the two
            # TensorCores on v7x whenever the grid has >=2 steps.
            dimension_semantics=("parallel",)),
    )(x2d, wqkv, bqkv)

    out = out2d[:N].reshape(N, L, Cout)
    probs = probs2d[:N].reshape(N, L, L)
    return out, probs


def _reference(x, wq, wk, wv, bq, bk, bv, head_size):
    q = x @ wq + bq
    k = x @ wk + bk
    v = x @ wv + bv
    s = jnp.einsum("nld,nmd->nlm", q, k) / math.sqrt(head_size)
    p = jax.nn.softmax(s, axis=-1)
    o = jnp.einsum("nlm,nmd->nld", p, v)
    return o, p


if __name__ == "__main__":
    # Small shapes consistent with the module's forward: (N, L, Cin) -> (N, L, Cout)
    N, L, hidden_size, head_size = 2, 8, 32, 16

    key = jax.random.PRNGKey(0)
    kx, kq, kk, kv, kbq, kbk, kbv = jax.random.split(key, 7)

    x = jax.random.normal(kx, (N, L, hidden_size), dtype=jnp.float32)

    # Deterministic parameter init (stored in the transposed (Cin, Cout) layout).
    s = 1.0 / math.sqrt(hidden_size)
    wq = jax.random.uniform(kq, (hidden_size, head_size), jnp.float32, -s, s)
    wk = jax.random.uniform(kk, (hidden_size, head_size), jnp.float32, -s, s)
    wv = jax.random.uniform(kv, (hidden_size, head_size), jnp.float32, -s, s)
    bq = jax.random.uniform(kbq, (1, head_size), jnp.float32, -s, s)
    bk = jax.random.uniform(kbk, (1, head_size), jnp.float32, -s, s)
    bv = jax.random.uniform(kbv, (1, head_size), jnp.float32, -s, s)

    ref_out, ref_probs = _reference(x, wq, wk, wv, bq, bk, bv, head_size)

    # Precise path (f32 matmuls, exact reciprocal) -- bit-tight vs the reference.
    out, probs = attention_head(x, wq, wk, wv, bq, bk, bv, head_size=head_size)
    out, probs = jax.block_until_ready((out, probs))
    assert out.shape == (N, L, head_size) and probs.shape == (N, L, L)
    assert jnp.allclose(out, ref_out, atol=1e-4, rtol=1e-4), "output mismatch"
    assert jnp.allclose(probs, ref_probs, atol=1e-4, rtol=1e-4), "probs mismatch"

    # Fast path (bf16 MXU operands + EUP approx reciprocal) -- looser tolerance.
    out_f, probs_f = attention_head(x, wq, wk, wv, bq, bk, bv, head_size=head_size,
                                    use_bf16_matmul=True, approx_reciprocal=True)
    out_f, probs_f = jax.block_until_ready((out_f, probs_f))
    assert jnp.allclose(out_f, ref_out, atol=5e-2, rtol=5e-2), "bf16 output mismatch"
    assert jnp.allclose(probs_f, ref_probs, atol=2e-2, rtol=5e-2), "bf16 probs mismatch"

    print("KERNEL_OK")
</pallas_src>

<mosaic_0001>
module attributes {stable_mosaic.version = 11 : i64} {
  func.func @_attention_head_kernel(%arg0: i32, %arg1: memref<16x32xf32, #tpu.memory_space<vmem>>, %arg2: memref<32x48xf32, #tpu.memory_space<vmem>>, %arg3: memref<1x48xf32, #tpu.memory_space<vmem>>, %arg4: memref<2x128xf32, #tpu.memory_space<vmem>>, %arg5: memref<2x64xf32, #tpu.memory_space<vmem>>) attributes {dimension_semantics = [#tpu.dimension_semantics<parallel>], iteration_bounds = array<i64: 1>, scalar_prefetch = 0 : i64, scratch_operands = 0 : i64, tpu.core_type = #tpu.core_type<tc>, window_params = [{transform_indices = @transform_0, window_bounds = array<i64: 16, 32>}, {pipeline_mode = #tpu.pipeline_mode<synchronous>, transform_indices = @transform_1, window_bounds = array<i64: 32, 48>}, {pipeline_mode = #tpu.pipeline_mode<synchronous>, transform_indices = @transform_2, window_bounds = array<i64: 1, 48>}, {transform_indices = @transform_3, window_bounds = array<i64: 2, 128>}, {transform_indices = @transform_4, window_bounds = array<i64: 2, 64>}]} {
    %c0 = arith.constant 0 : index
    %c0_0 = arith.constant 0 : index
    %0 = vector.load %arg1[%c0, %c0_0] : memref<16x32xf32, #tpu.memory_space<vmem>>, vector<16x32xf32>
    %c0_1 = arith.constant 0 : index
    %c0_2 = arith.constant 0 : index
    %1 = vector.load %arg2[%c0_1, %c0_2] : memref<32x48xf32, #tpu.memory_space<vmem>>, vector<32x48xf32>
    %cst = arith.constant dense<0.000000e+00> : vector<16x48xf32>
    %2 = tpu.matmul %0, %1, %cst {dimension_numbers = #tpu.dot_dimension_numbers<[1], [0], [0], [1], [0, 0, 1, 1], [], []>} : vector<16x32xf32>, vector<32x48xf32>, vector<16x48xf32> -> vector<16x48xf32>
    %c0_3 = arith.constant 0 : index
    %c0_4 = arith.constant 0 : index
    %3 = vector.load %arg3[%c0_3, %c0_4] : memref<1x48xf32, #tpu.memory_space<vmem>>, vector<1x48xf32>
    %4 = vector.broadcast %3 : vector<1x48xf32> to vector<16x48xf32>
    %5 = arith.addf %2, %4 : vector<16x48xf32>
    %6 = vector.extract_strided_slice %5 {offsets = [0, 0], sizes = [16, 16], strides = [1, 1]} : vector<16x48xf32> to vector<16x16xf32>
    %7 = vector.shape_cast %6 : vector<16x16xf32> to vector<2x8x16xf32>
    %8 = vector.extract_strided_slice %5 {offsets = [0, 16], sizes = [16, 16], strides = [1, 1]} : vector<16x48xf32> to vector<16x16xf32>
    %9 = vector.shape_cast %8 : vector<16x16xf32> to vector<2x8x16xf32>
    %10 = vector.extract_strided_slice %5 {offsets = [0, 32], sizes = [16, 16], strides = [1, 1]} : vector<16x48xf32> to vector<16x16xf32>
    %11 = vector.shape_cast %10 : vector<16x16xf32> to vector<2x8x16xf32>
    "tpu.trace_start"() <{level = 10 : i32, message = "bld,bmd->blm"}> : () -> ()
    %cst_5 = arith.constant dense<0.000000e+00> : vector<2x8x8xf32>
    %12 = tpu.matmul %7, %9, %cst_5 {dimension_numbers = #tpu.dot_dimension_numbers<[2], [2], [1], [1], [0, 0, 0, 1, 1, 1], [0], [0]>} : vector<2x8x16xf32>, vector<2x8x16xf32>, vector<2x8x8xf32> -> vector<2x8x8xf32>
    "tpu.trace_stop"() : () -> ()
    %cst_6 = arith.constant dense<0xFF800000> : vector<2x8xf32>
    %13 = vector.multi_reduction <maximumf>, %12, %cst_6 [2] : vector<2x8x8xf32> to vector<2x8xf32>
    %14 = vector.shape_cast %13 : vector<2x8xf32> to vector<2x8x1xf32>
    %15 = vector.broadcast %14 : vector<2x8x1xf32> to vector<2x8x8xf32>
    %16 = arith.subf %12, %15 : vector<2x8x8xf32>
    %17 = math.exp %16 : vector<2x8x8xf32>
    %cst_7 = arith.constant dense<0.000000e+00> : vector<2x8xf32>
    %18 = vector.multi_reduction <add>, %17, %cst_7 [2] : vector<2x8x8xf32> to vector<2x8xf32>
    %19 = vector.shape_cast %18 : vector<2x8xf32> to vector<2x8x1xf32>
    %20 = tpu.reciprocal %19 : vector<2x8x1xf32> -> vector<2x8x1xf32>
    %21 = vector.broadcast %20 : vector<2x8x1xf32> to vector<2x8x8xf32>
    %22 = arith.mulf %17, %21 : vector<2x8x8xf32>
    "tpu.trace_start"() <{level = 10 : i32, message = "blm,bmd->bld"}> : () -> ()
    %cst_8 = arith.constant dense<0.000000e+00> : vector<2x8x16xf32>
    %23 = tpu.matmul %22, %11, %cst_8 {dimension_numbers = #tpu.dot_dimension_numbers<[2], [1], [1], [2], [0, 0, 0, 1, 1, 2], [0], [0]>} : vector<2x8x8xf32>, vector<2x8x16xf32>, vector<2x8x16xf32> -> vector<2x8x16xf32>
    "tpu.trace_stop"() : () -> ()
    %24 = vector.shape_cast %23 : vector<2x8x16xf32> to vector<2x128xf32>
    %c0_9 = arith.constant 0 : index
    %c0_10 = arith.constant 0 : index
    %25 = vector.load %arg4[%c0_9, %c0_10] : memref<2x128xf32, #tpu.memory_space<vmem>>, vector<2x128xf32>
    tpu.vector_store %arg4[%c0_9, %c0_10], %24 {strides = array<i32>} : memref<2x128xf32, #tpu.memory_space<vmem>>, vector<2x128xf32>,
    %26 = vector.shape_cast %22 : vector<2x8x8xf32> to vector<2x64xf32>
    %c0_11 = arith.constant 0 : index
    %c0_12 = arith.constant 0 : index
    %27 = vector.load %arg5[%c0_11, %c0_12] : memref<2x64xf32, #tpu.memory_space<vmem>>, vector<2x64xf32>
    tpu.vector_store %arg5[%c0_11, %c0_12], %26 {strides = array<i32>} : memref<2x64xf32, #tpu.memory_space<vmem>>, vector<2x64xf32>,
    return
  }
  func.func @transform_0(%arg0: i32) -> (i32, i32) {
    %c0_i32 = arith.constant 0 : i32
    %c0_i32_0 = arith.constant 0 : i32
    return %arg0, %c0_i32 : i32, i32
  }
  func.func @transform_1(%arg0: i32) -> (i32, i32) {
    %c0_i32 = arith.constant 0 : i32
    %c0_i32_0 = arith.constant 0 : i32
    %c0_i32_1 = arith.constant 0 : i32
    return %c0_i32, %c0_i32_0 : i32, i32
  }
  func.func @transform_2(%arg0: i32) -> (i32, i32) {
    %c0_i32 = arith.constant 0 : i32
    %c0_i32_0 = arith.constant 0 : i32
    %c0_i32_1 = arith.constant 0 : i32
    return %c0_i32, %c0_i32_0 : i32, i32
  }
  func.func @transform_3(%arg0: i32) -> (i32, i32) {
    %c0_i32 = arith.constant 0 : i32
    %c0_i32_0 = arith.constant 0 : i32
    return %arg0, %c0_i32 : i32, i32
  }
  func.func @transform_4(%arg0: i32) -> (i32, i32) {
    %c0_i32 = arith.constant 0 : i32
    %c0_i32_0 = arith.constant 0 : i32
    return %arg0, %c0_i32 : i32, i32
  }
}

</mosaic_0001>

<llo_original>
// kernel: tpu_custom_call.1
$region0: #{tpu_custom_call.1}
  #allocation0 [shape = 'u32[]', space=smem, size = 0x4, offset = 0x4, fixed_abs, tag = 'smem constant byte address 0x4 - core index']
  #allocation1 [shape = 'u32[72,128]{1,0:T(1,128)}', space=vmem, size = 0x9000, scoped, tag = 'internal scratch']
  %s0 = inlined_call_operand.hbm [shape: f32[16,32], index: 0, kind: input, shape index: {}]
  %s1 = inlined_call_operand.hbm [shape: f32[32,48], index: 1, kind: input, shape index: {}]
  %s2 = inlined_call_operand.vmem [shape: f32[1,48], index: 2, kind: input, shape index: {}]
  %s3 = inlined_call_operand.hbm [shape: f32[2,128], index: 3, kind: output, shape index: {0}]
  %s4 = inlined_call_operand.hbm [shape: f32[2,64], index: 4, kind: output, shape index: {1}]
  %5 = xla_tuple %s3, %s4
  %s6 = sld [smem:[#allocation0]]
  $region38: #{tpu_custom_call.1} parent=0
    _
  %s8 = ssub.s32 1, %s6
  %s9 = scalar_select 0, %s8, %s6
  $region1: #{tpu_custom_call.1} parent=0
    #allocation2 [shape = 'u8[8192]{0}', space=vmem, size = 0x2000, scoped, tag = 'input window, operand 0, single buffered']
    #allocation3 [shape = 's32[1]{0}', space=sflag, size = 0x4, scoped, tag = 'scoped memory for tpu_custom_call.1']
    #allocation4 [shape = 's32[1]{0}', space=sflag, size = 0x4, scoped, tag = 'scoped memory for tpu_custom_call.1']
    #allocation5 [shape = 'u8[16384]{0}', space=vmem, size = 0x4000, scoped, tag = 'input window, operand 1, single buffered']
    #allocation6 [shape = 's32[1]{0}', space=sflag, size = 0x4, scoped, tag = 'scoped memory for tpu_custom_call.1']
    #allocation7 [shape = 'u8[1024]{0}', space=vmem, size = 0x400, scoped, tag = 'output window, operand 0, single buffered']
    #allocation8 [shape = 'u8[1024]{0}', space=vmem, size = 0x400, scoped, tag = 'output window, operand 1, single buffered']
    #allocation9 [shape = 's32[1]{0}', space=sflag, size = 0x4, scoped, tag = 'scoped memory for tpu_custom_call.1']
    %10 = vsyncpa [#allocation3], 0
    %11 = vsyncpa [#allocation6], 0
    %12 = vsyncpa [#allocation4], 0
    %13 = vsyncpa [#allocation9], 0
    // Predicated region
    $region2: #{tpu_custom_call.1} parent=1 // pred_check
      _
    $region3: #{tpu_custom_call.1} parent=1 // pred_check_branch
      %15 = sbr.rel (0) target = $region5
    $region4: #{tpu_custom_call.1} parent=1 // pred_region
      %17 = vsyncadd [#allocation3], 0
      %s18 = sshll.u32 %s0, 4
      %s19 = int_to_ptr.hbm [resolvable:$true] %s18
      %s20 = sshll.u32 [#allocation2], 4
      %s21 = int_to_ptr.vmem [resolvable:$true] %s20
      %26 = dma.hbm_to_vmem [thread:$0]  %s19, 256, %s21, [#allocation3], 128, 128, 8
    $region5: #{tpu_custom_call.1} parent=1 // pred_fallthru
      _
    // Predicated region
    $region6: #{tpu_custom_call.1} parent=1 // pred_check
      _
    $region7: #{tpu_custom_call.1} parent=1 // pred_check_branch
      %28 = sbr.rel (0) target = $region9
    $region8: #{tpu_custom_call.1} parent=1 // pred_region
      %30 = vsyncadd [#allocation6], 0
      %s31 = sshll.u32 %s1, 4
      %s32 = int_to_ptr.hbm [resolvable:$true] %s31
      %s33 = sshll.u32 [#allocation5], 4
      %s34 = int_to_ptr.vmem [resolvable:$true] %s33
      %39 = dma.hbm_to_vmem [thread:$0]  %s32, 512, %s34, [#allocation6], 128, 128, 8
    $region9: #{tpu_custom_call.1} parent=1 // pred_fallthru
      _
    // Predicated region
    $region10: #{tpu_custom_call.1} parent=1 // pred_check
      _
    $region11: #{tpu_custom_call.1} parent=1 // pred_check_branch
      %41 = sbr.rel (0) target = $region13
    $region12: #{tpu_custom_call.1} parent=1 // pred_region
      _
    $region13: #{tpu_custom_call.1} parent=1 // pred_fallthru
      _
    // Predicated region
    $region14: #{tpu_custom_call.1} parent=1 // pred_check
      _
    $region15: #{tpu_custom_call.1} parent=1 // pred_check_branch
      %43 = sbr.rel (0) target = $region17
    $region16: #{tpu_custom_call.1} parent=1 // pred_region
      %45 = dma.done [#allocation3], 256
    $region17: #{tpu_custom_call.1} parent=1 // pred_fallthru
      _
    // Predicated region
    $region18: #{tpu_custom_call.1} parent=1 // pred_check
      _
    $region19: #{tpu_custom_call.1} parent=1 // pred_check_branch
      %47 = sbr.rel (0) target = $region21
    $region20: #{tpu_custom_call.1} parent=1 // pred_region
      %49 = dma.done [#allocation6], 512
    $region21: #{tpu_custom_call.1} parent=1 // pred_fallthru
      _
    %v50 = vld [vmem:[#allocation2] sm:$0xff]
    %v51 = vld [vmem:[#allocation2 + $0x8] sm:$0xff]
    %v52 = vld [vmem:[#allocation5] sm:$0xff]
    %v53 = vld [vmem:[#allocation5 + $0x8] sm:$0xff]
    %v54 = vld [vmem:[#allocation5 + $0x10] sm:$0xff]
    %v55 = vld [vmem:[#allocation5 + $0x18] sm:$0xff]
    %v56 = vld [vmem:[%s2] sm:$0x1]
    %v58 = vperm.slane %v56, 0
    %vm60 = vcmask 261120
    %v62 = vsel %vm60, %v50, 0
    %v65 = vsel %vm60, %v51, 0
    %67 = vmatpush.msra.mxu0 0.0
    %68 = vmatpush.msra.mxu0 0.0
    %69 = vmatpush.msra.mxu0 0.0
    %70 = vmatpush.msra.mxu0 0.0
    %71 = vmatpush.msra.mxu0 0.0
    %72 = vmatpush.msra.mxu0 0.0
    %73 = vmatpush.msra.mxu0 0.0
    %74 = vmatpush.msra.mxu0 0.0
    %75 = vmatpush.msra.mxu0 0.0
    %76 = vmatpush.msra.mxu0 0.0
    %77 = vmatpush.msra.mxu0 0.0
    %78 = vmatpush.msra.mxu0 0.0
    %79 = vmatpush.msra.mxu0 %v55
    %80 = vmatpush.msra.mxu0 %v54
    %81 = vmatpush.msra.mxu0 %v53
    %82 = vmatpush.msra.mxu0 %v52
    %83 = vmatmul.f32.gmra.mxu0 %v62
    %v84 = vpop.f32.mrf.mxu0
    %v85 = vadd.f32 %v58, %v84
    %86 = vmatmul.f32.gmra.mxu0 %v65
    %v87 = vpop.f32.mrf.mxu0
    %v88 = vadd.f32 %v58, %v87
    %89 = vdwg.mxu0
    %91 = vrot.lane.b32.xlu0 %v85, 112
    %v92 = vpop.permute.xlu0 %91
    %vm93 = vcmask 130048
    %v94 = vsel %vm93, %v85, 0
    %v96 = vsel %vm93, %v92, 0
    %98 = vmatpush.xpose.msra.mxu0 0.0
    %99 = vmatpush.xpose.msra.mxu0 0.0
    %100 = vmatpush.xpose.msra.mxu0 0.0
    %101 = vmatpush.xpose.msra.mxu0 0.0
    %102 = vmatpush.xpose.msra.mxu0 0.0
    %103 = vmatpush.xpose.msra.mxu0 0.0
    %104 = vmatpush.xpose.msra.mxu0 0.0
    %105 = vmatpush.xpose.msra.mxu0 0.0
    %106 = vmatpush.xpose.msra.mxu0 0.0
    %107 = vmatpush.xpose.msra.mxu0 0.0
    %108 = vmatpush.xpose.msra.mxu0 0.0
    %109 = vmatpush.xpose.msra.mxu0 0.0
    %110 = vmatpush.xpose.msra.mxu0 0.0
    %111 = vmatpush.xpose.msra.mxu0 0.0
    %112 = vmatpush.xpose.msra.mxu0 0.0
    %113 = vmatpush.xpose.msra.mxu0 %v96
    %114 = vmatmul.f32.gmra.mxu0 %v94
    %v115 = vpop.f32.mrf.mxu0
    %v116 = vadd.f32 0.0, %v115
    %117 = vdwg.mxu0
    %119 = vrot.lane.b32.xlu0 %v88, 112
    %v120 = vpop.permute.xlu0 %119
    %v121 = vsel %vm93, %v88, 0
    %v123 = vsel %vm93, %v120, 0
    %125 = vmatpush.xpose.msra.mxu0 0.0
    %126 = vmatpush.xpose.msra.mxu0 0.0
    %127 = vmatpush.xpose.msra.mxu0 0.0
    %128 = vmatpush.xpose.msra.mxu0 0.0
    %129 = vmatpush.xpose.msra.mxu0 0.0
    %130 = vmatpush.xpose.msra.mxu0 0.0
    %131 = vmatpush.xpose.msra.mxu0 0.0
    %132 = vmatpush.xpose.msra.mxu0 0.0
    %133 = vmatpush.xpose.msra.mxu0 0.0
    %134 = vmatpush.xpose.msra.mxu0 0.0
    %135 = vmatpush.xpose.msra.mxu0 0.0
    %136 = vmatpush.xpose.msra.mxu0 0.0
    %137 = vmatpush.xpose.msra.mxu0 0.0
    %138 = vmatpush.xpose.msra.mxu0 0.0
    %139 = vmatpush.xpose.msra.mxu0 0.0
    %140 = vmatpush.xpose.msra.mxu0 %v123
    %141 = vmatmul.f32.gmra.mxu0 %v121
    %v142 = vpop.f32.mrf.mxu0
    %v143 = vadd.f32 0.0, %v142
    %144 = vdwg.mxu0
    %vm145 = vcmask 64512
    %v146 = vsel %vm145, %v116, -inf
    %147 = vmax.xlane.f32.xlu0 %v146
    %v148 = vpop.xlane.xlu0 %147
    %v149 = vsel %vm145, %v143, -inf
    %150 = vmax.xlane.f32.xlu0 %v149
    %v151 = vpop.xlane.xlu0 %150
    %v152 = vsub.f32 %v116, %v148
    %v153 = vsub.f32 %v143, %v151
    %v154 = vmul.f32 %v152, 1.442695
    %v155 = vpow.pop %v154
    %v156 = vmul.f32 %v153, 1.442695
    %v157 = vpow.pop %v156
    %v158 = vsel %vm145, %v155, 0.0
    %159 = vadd.xlane.f32.xlu0 %v158
    %v160 = vpop.xlane.xlu0 %159
    %v161 = vsel %vm145, %v157, 0.0
    %162 = vadd.xlane.f32.xlu0 %v161
    %v163 = vpop.xlane.xlu0 %162
    %v164 = vrcp.pop %v160
    %v165 = vmul.f32 %v160, %v164
    %v166 = vsub.f32 1.0, %v165
    %v167 = vmul.f32 %v164, %v166
    %v168 = vadd.f32 %v164, %v167
    %vm169 = vweird.f32 %v160
    %vm170 = vweird.f32 %v164
    %vm171 = vmor %vm169, %vm170
    %v172 = vsel %vm171, %v164, %v168
    %v173 = vand.u32 2147483647, %v160
    %vm174 = vcmp.eq.f32.partialorder %v173, 8.507059e+37
    %v175 = vand.u32 %v160, 2147483648
    %v176 = vor.u32 1.1754944e-38, %v175
    %v177 = vsel %vm174, %v176, %v172
    %v178 = vrcp.pop %v163
    %v179 = vmul.f32 %v163, %v178
    %v180 = vsub.f32 1.0, %v179
    %v181 = vmul.f32 %v178, %v180
    %v182 = vadd.f32 %v178, %v181
    %vm183 = vweird.f32 %v163
    %vm184 = vweird.f32 %v178
    %vm185 = vmor %vm183, %vm184
    %v186 = vsel %vm185, %v178, %v182
    %v187 = vand.u32 2147483647, %v163
    %vm188 = vcmp.eq.f32.partialorder %v187, 8.507059e+37
    %v189 = vand.u32 %v163, 2147483648
    %v190 = vor.u32 1.1754944e-38, %v189
    %v191 = vsel %vm188, %v190, %v186
    %v192 = vmul.f32 %v155, %v177
    %v193 = vmul.f32 %v157, %v191
    %194 = vrot.lane.b32.xlu0 %v85, 96
    %v195 = vpop.permute.xlu0 %194
    %v198 = vsel %vm145, %v192, 0
    %200 = vmatpush.msra.mxu0 0.0
    %201 = vmatpush.msra.mxu0 0.0
    %202 = vmatpush.msra.mxu0 0.0
    %203 = vmatpush.msra.mxu0 0.0
    %204 = vmatpush.msra.mxu0 0.0
    %205 = vmatpush.msra.mxu0 0.0
    %206 = vmatpush.msra.mxu0 0.0
    %207 = vmatpush.msra.mxu0 0.0
    %208 = vmatpush.msra.mxu0 0.0
    %209 = vmatpush.msra.mxu0 0.0
    %210 = vmatpush.msra.mxu0 0.0
    %211 = vmatpush.msra.mxu0 0.0
    %212 = vmatpush.msra.mxu0 0.0
    %213 = vmatpush.msra.mxu0 0.0
    %214 = vmatpush.msra.mxu0 0.0
    %215 = vmatpush.msra.mxu0 %v195
    %216 = vmatmul.f32.gmra.mxu0 %v198
    %v217 = vpop.f32.mrf.mxu0
    %v218 = vadd.f32 0.0, %v217
    %219 = vdwg.mxu0
    %220 = vrot.lane.b32.xlu0 %v88, 96
    %v221 = vpop.permute.xlu0 %220
    %v224 = vsel %vm145, %v193, 0
    %226 = vmatpush.msra.mxu0 0.0
    %227 = vmatpush.msra.mxu0 0.0
    %228 = vmatpush.msra.mxu0 0.0
    %229 = vmatpush.msra.mxu0 0.0
    %230 = vmatpush.msra.mxu0 0.0
    %231 = vmatpush.msra.mxu0 0.0
    %232 = vmatpush.msra.mxu0 0.0
    %233 = vmatpush.msra.mxu0 0.0
    %234 = vmatpush.msra.mxu0 0.0
    %235 = vmatpush.msra.mxu0 0.0
    %236 = vmatpush.msra.mxu0 0.0
    %237 = vmatpush.msra.mxu0 0.0
    %238 = vmatpush.msra.mxu0 0.0
    %239 = vmatpush.msra.mxu0 0.0
    %240 = vmatpush.msra.mxu0 0.0
    %241 = vmatpush.msra.mxu0 %v221
    %242 = vmatmul.f32.gmra.mxu0 %v224
    %v243 = vpop.f32.mrf.mxu0
    %v244 = vadd.f32 0.0, %v243
    %245 = vdwg.mxu0
    %v246 = vrot.slane %v218, 4
    %vm247 = vcmask 1047556
    %v248 = vsel %vm247, 0.0, %v246
    %v250 = vunpack.c.l.s4 1983009808
    %v251 = vunpack.c.0.s8 %v250
    %v252 = vperm.slane %v218, %v251
    %v254 = vunpack.c.l.s4 1983009808
    %v255 = vunpack.c.0.s8 %v254
    %v256 = vperm.slane %v248, %v255
    %v257 = vrot.slane %v244, 4
    %v258 = vsel %vm247, 0.0, %v257
    %v260 = vunpack.c.l.s4 1983009808
    %v261 = vunpack.c.0.s8 %v260
    %v262 = vperm.slane %v244, %v261
    %v264 = vunpack.c.l.s4 1983009808
    %v265 = vunpack.c.0.s8 %v264
    %v266 = vperm.slane %v258, %v265
    %v267 = vrot.slane %v262, 4
    %v268 = vsel %vm247, %v267, %v252
    %v269 = vrot.slane %v252, 4
    %v270 = vsel %vm247, %v262, %v269
    %v272 = vunpack.c.l.s4 1934713408
    %v273 = vunpack.c.0.s8 %v272
    %v274 = vperm.slane %v268, %v273
    %v276 = vunpack.c.l.s4 1934713408
    %v277 = vunpack.c.0.s8 %v276
    %v278 = vperm.slane %v270, %v277
    %v279 = vrot.slane %v266, 4
    %v280 = vsel %vm247, %v279, %v256
    %v281 = vrot.slane %v256, 4
    %v282 = vsel %vm247, %v266, %v281
    %v284 = vunpack.c.l.s4 1934713408
    %v285 = vunpack.c.0.s8 %v284
    %v286 = vperm.slane %v280, %v285
    %v288 = vunpack.c.l.s4 1934713408
    %v289 = vunpack.c.0.s8 %v288
    %v290 = vperm.slane %v282, %v289
    %v291 = vrot.slane %v274, 4
    %v292 = vsel %vm247, 0.0, %v291
    %v293 = vrot.slane %v278, 4
    %v294 = vsel %vm247, 0.0, %v293
    %v295 = vrot.slane %v286, 4
    %v296 = vsel %vm247, 0.0, %v295
    %v297 = vrot.slane %v290, 4
    %v298 = vsel %vm247, 0.0, %v297
    %300 = vrot.lane.b32.xlu0 %v292, 16
    %v301 = vpop.permute.xlu0 %300
    %304 = vrot.lane.b32.xlu0 %v278, 32
    %v305 = vpop.permute.xlu0 %304
    %308 = vrot.lane.b32.xlu0 %v294, 48
    %v309 = vpop.permute.xlu0 %308
    %312 = vrot.lane.b32.xlu0 %v286, 64
    %v313 = vpop.permute.xlu0 %312
    %316 = vrot.lane.b32.xlu0 %v296, 80
    %v317 = vpop.permute.xlu0 %316
    %320 = vrot.lane.b32.xlu0 %v290, 96
    %v321 = vpop.permute.xlu0 %320
    %324 = vrot.lane.b32.xlu0 %v298, 112
    %v325 = vpop.permute.xlu0 %324
    %v327 = vsel %vm93, %v274, %v301
    %v328 = vsel %vm60, %v327, %v305
    %vm329 = vcmask 392192
    %v330 = vsel %vm329, %v328, %v309
    %vm331 = vcmask 523264
    %v332 = vsel %vm331, %v330, %v313
    %vm333 = vcmask 654336
    %v334 = vsel %vm333, %v332, %v317
    %vm335 = vcmask 785408
    %v336 = vsel %vm335, %v334, %v321
    %vm337 = vcmask 916480
    %v338 = vsel %vm337, %v336, %v325
    %339 = vst [vmem:[#allocation7] sm:$0x3] %v338
    %v340 = vrot.slane %v192, 4
    %v341 = vsel %vm247, 0.0, %v340
    %v343 = vunpack.c.l.s4 1983009808
    %v344 = vunpack.c.0.s8 %v343
    %v345 = vperm.slane %v192, %v344
    %v347 = vunpack.c.l.s4 1983009808
    %v348 = vunpack.c.0.s8 %v347
    %v349 = vperm.slane %v341, %v348
    %v350 = vrot.slane %v193, 4
    %v351 = vsel %vm247, 0.0, %v350
    %v353 = vunpack.c.l.s4 1983009808
    %v354 = vunpack.c.0.s8 %v353
    %v355 = vperm.slane %v193, %v354
    %v357 = vunpack.c.l.s4 1983009808
    %v358 = vunpack.c.0.s8 %v357
    %v359 = vperm.slane %v351, %v358
    %v360 = vrot.slane %v355, 4
    %v361 = vsel %vm247, %v360, %v345
    %v362 = vrot.slane %v345, 4
    %v363 = vsel %vm247, %v355, %v362
    %v365 = vunpack.c.l.s4 1934713408
    %v366 = vunpack.c.0.s8 %v365
    %v367 = vperm.slane %v361, %v366
    %v369 = vunpack.c.l.s4 1934713408
    %v370 = vunpack.c.0.s8 %v369
    %v371 = vperm.slane %v363, %v370
    %v372 = vrot.slane %v359, 4
    %v373 = vsel %vm247, %v372, %v349
    %v374 = vrot.slane %v349, 4
    %v375 = vsel %vm247, %v359, %v374
    %v377 = vunpack.c.l.s4 1934713408
    %v378 = vunpack.c.0.s8 %v377
    %v379 = vperm.slane %v373, %v378
    %v381 = vunpack.c.l.s4 1934713408
    %v382 = vunpack.c.0.s8 %v381
    %v383 = vperm.slane %v375, %v382
    %v384 = vrot.slane %v367, 4
    %v385 = vsel %vm247, 0.0, %v384
    %v386 = vrot.slane %v371, 4
    %v387 = vsel %vm247, 0.0, %v386
    %v388 = vrot.slane %v379, 4
    %v389 = vsel %vm247, 0.0, %v388
    %v390 = vrot.slane %v383, 4
    %v391 = vsel %vm247, 0.0, %v390
    %393 = vrot.lane.b32.xlu0 %v385, 8
    %v394 = vpop.permute.xlu0 %393
    %397 = vrot.lane.b32.xlu0 %v371, 16
    %v398 = vpop.permute.xlu0 %397
    %401 = vrot.lane.b32.xlu0 %v387, 24
    %v402 = vpop.permute.xlu0 %401
    %405 = vrot.lane.b32.xlu0 %v379, 32
    %v406 = vpop.permute.xlu0 %405
    %409 = vrot.lane.b32.xlu0 %v389, 40
    %v410 = vpop.permute.xlu0 %409
    %413 = vrot.lane.b32.xlu0 %v383, 48
    %v414 = vpop.permute.xlu0 %413
    %417 = vrot.lane.b32.xlu0 %v391, 56
    %v418 = vpop.permute.xlu0 %417
    %v420 = vsel %vm145, %v367, %v394
    %v421 = vsel %vm93, %v420, %v398
    %vm422 = vcmask 195584
    %v423 = vsel %vm422, %v421, %v402
    %v424 = vsel %vm60, %v423, %v406
    %vm425 = vcmask 326656
    %v426 = vsel %vm425, %v424, %v410
    %v427 = vsel %vm329, %v426, %v414
    %vm428 = vcmask 457728
    %v429 = vsel %vm428, %v427, %v418
    %vm430 = vcmask 517120
    %431 = vst.msk [vmem:[#allocation8] sm:$0x3] %vm430, %v429
    // Predicated region
    $region22: #{tpu_custom_call.1} parent=1 // pred_check
      _
    $region23: #{tpu_custom_call.1} parent=1 // pred_check_branch
      %433 = sbr.rel (0) target = $region25
    $region24: #{tpu_custom_call.1} parent=1 // pred_region
      %435 = vsyncadd [#allocation4], 0
      %s437 = sshll.u32 [#allocation7], 4
      %s438 = int_to_ptr.vmem [resolvable:$true] %s437
      %s439 = sshll.u32 %s3, 4
      %s440 = int_to_ptr.hbm [resolvable:$true] %s439
      %442 = dma.vmem_to_hbm [thread:$0]  %s438, 32, %s440, [#allocation4]
    $region25: #{tpu_custom_call.1} parent=1 // pred_fallthru
      _
    // Predicated region
    $region26: #{tpu_custom_call.1} parent=1 // pred_check
      _
    $region27: #{tpu_custom_call.1} parent=1 // pred_check_branch
      %444 = sbr.rel (0) target = $region29
    $region28: #{tpu_custom_call.1} parent=1 // pred_region
      %446 = vsyncadd [#allocation9], 0
      %s448 = sshll.u32 [#allocation8], 4
      %s449 = int_to_ptr.vmem [resolvable:$true] %s448
      %s450 = sshll.u32 %s4, 4
      %s451 = int_to_ptr.hbm [resolvable:$true] %s450
      %453 = dma.vmem_to_hbm [thread:$0]  %s449, 32, %s451, [#allocation9]
    $region29: #{tpu_custom_call.1} parent=1 // pred_fallthru
      _
    // Predicated region
    $region30: #{tpu_custom_call.1} parent=1 // pred_check
      _
    $region31: #{tpu_custom_call.1} parent=1 // pred_check_branch
      %455 = sbr.rel (0) target = $region33
    $region32: #{tpu_custom_call.1} parent=1 // pred_region
      %457 = dma.done [#allocation4], 32
    $region33: #{tpu_custom_call.1} parent=1 // pred_fallthru
      _
    // Predicated region
    $region34: #{tpu_custom_call.1} parent=1 // pred_check
      _
    $region35: #{tpu_custom_call.1} parent=1 // pred_check_branch
      %459 = sbr.rel (0) target = $region37
    $region36: #{tpu_custom_call.1} parent=1 // pred_region
      %461 = dma.done [#allocation9], 32
    $region37: #{tpu_custom_call.1} parent=1 // pred_fallthru
      _
    %462 = vsyncpa [#allocation3], 1
    %463 = vsyncpa [#allocation6], 1
    %464 = vsyncpa [#allocation4], 1
    %465 = vsyncpa [#allocation9], 1

</llo_original>
